<compile_context>
chip_gen: v7x
topology: tpu7x:2x2x1
jax: 0.10.0
libtpu: 0.0.40
codegen_flags: <defaults>
</compile_context>

<pallas_src>
import functools

import jax
import jax.numpy as jnp
from jax.experimental import pallas as pl
from jax.experimental.pallas import tpu as pltpu


# ----------------------------------------------------------------------------
# Helpers
# ----------------------------------------------------------------------------
def _round_up(x, m):
    return -(-x // m) * m


def _resident(shape):
    # Whole-array block with a constant block index: stays VMEM-resident and
    # is not re-DMA'd across grid steps.
    return pl.BlockSpec(shape, lambda i: (0, 0))


def _choose_tiling(B, tm_cap):
    """Pick (tile_m, padded_batch, n_tiles).

    - tiles are multiples of 16 (bf16 sublane packing),
    - tiles are as large as possible (per-step pipeline overhead dominates),
    - at least 2 grid steps when the batch is big enough, so the "parallel"
      batch axis can be sharded across both v7x TensorCores.
    """
    Bp16 = _round_up(B, 16)
    min_tiles = 2 if Bp16 >= 32 else 1
    n_tiles = max(min_tiles, pl.cdiv(Bp16, tm_cap))
    tm = _round_up(pl.cdiv(Bp16, n_tiles), 16)
    Bp = n_tiles * tm
    return tm, Bp, n_tiles


# ----------------------------------------------------------------------------
# Kernel: fused twin-Q MLP on one batch tile.
# ----------------------------------------------------------------------------
def _critic_kernel(s_ref, a_ref, w1_ref, b1_ref, w2h_ref, w2a_ref, b2_ref,
                   wq_ref, bq_ref, q_ref):
    # In-kernel cast of the activations to the MXU dtype (no-op for f32
    # weights).  All accumulation and elementwise math stays f32.
    s = s_ref[...].astype(w1_ref.dtype)                 # (tm, D)
    a = a_ref[...].astype(w2a_ref.dtype)                # (tm, A)

    # fc1 (both heads) + ReLU.
    h1 = jnp.dot(s, w1_ref[...], preferred_element_type=jnp.float32) + b1_ref[...]
    h1 = jnp.maximum(h1, 0.0)

    # fc2 over concat([h1, action]) as a split matmul (block-diag hidden part).
    h2 = (jnp.dot(h1.astype(w2h_ref.dtype), w2h_ref[...],
                  preferred_element_type=jnp.float32)
          + jnp.dot(a, w2a_ref[...], preferred_element_type=jnp.float32)
          + b2_ref[...])
    h2 = jnp.maximum(h2, 0.0)

    # Final linear: block-diagonal head -> (tm, 2) == [q1 | q2].
    q_ref[...] = (jnp.dot(h2.astype(wq_ref.dtype), wq_ref[...],
                          preferred_element_type=jnp.float32) + bq_ref[...])


# ----------------------------------------------------------------------------
# Wrapper
# ----------------------------------------------------------------------------
@functools.partial(jax.jit, static_argnames=("tm_cap",))
def critic_forward(state, action, fused_params, *, tm_cap=8192):
    """Twin-Q forward pass. Returns (q1, q2), each (B, 1) float32.

    The q[:B] trim and the two column slices live inside this jit, so they
    fuse with surrounding computation instead of becoming standalone ops.
    """
    w1f, b1f, w2h, w2af, b2f, wqf, bqf = fused_params
    B, D = state.shape
    A = action.shape[1]

    tm, Bp, n_tiles = _choose_tiling(B, tm_cap)
    if Bp != B:
        state = jnp.pad(state, ((0, Bp - B), (0, 0)))
        action = jnp.pad(action, ((0, Bp - B), (0, 0)))

    f1x2 = w1f.shape[1]
    f2x2 = w2h.shape[1]
    flops = 2 * Bp * (D * f1x2 + f1x2 * f2x2 + A * f2x2 + f2x2 * 2)
    bytes_accessed = (int(state.nbytes) + int(action.nbytes)
                      + sum(int(p.nbytes) for p in fused_params)
                      + Bp * 2 * 4)

    q = pl.pallas_call(
        _critic_kernel,
        out_shape=jax.ShapeDtypeStruct((Bp, 2), jnp.float32),
        grid_spec=pltpu.PrefetchScalarGridSpec(
            num_scalar_prefetch=0,
            grid=(n_tiles,),
            in_specs=[
                pl.BlockSpec((tm, D), lambda i: (i, 0)),   # state tile
                pl.BlockSpec((tm, A), lambda i: (i, 0)),   # action tile
                _resident(w1f.shape), _resident(b1f.shape),
                _resident(w2h.shape), _resident(w2af.shape), _resident(b2f.shape),
                _resident(wqf.shape), _resident(bqf.shape),
            ],
            out_specs=pl.BlockSpec((tm, 2), lambda i: (i, 0)),
        ),
        compiler_params=pltpu.CompilerParams(
            dimension_semantics=("parallel",)),
        cost_estimate=pl.CostEstimate(flops=flops, transcendentals=0,
                                      bytes_accessed=bytes_accessed),
    )(state, action, w1f, b1f, w2h, w2af, b2f, wqf, bqf)

    q = q[:B]
    return q[:, 0:1], q[:, 1:2]


# ----------------------------------------------------------------------------
# Parameter construction (Kaiming-normal weights, zero biases), matching
# nn.init.kaiming_normal_(w, nonlinearity='relu') on torch Linear weights of
# shape [out, in] (fan_in = in_features), transposed to [in, out] for x @ W.
# ----------------------------------------------------------------------------
def _kaiming_linear(key, in_features, out_features):
    std = (2.0 / in_features) ** 0.5
    w = jax.random.normal(key, (out_features, in_features), jnp.float32) * std
    return w.T  # [in, out]


def make_params(key, input_dim, fc1_dims, fc2_dims, n_actions):
    keys = jax.random.split(key, 6)
    # Q1 head
    w1 = _kaiming_linear(keys[0], input_dim, fc1_dims)
    b1 = jnp.zeros((1, fc1_dims), jnp.float32)
    w2 = _kaiming_linear(keys[1], fc1_dims + n_actions, fc2_dims)
    w2x, w2a = w2[:fc1_dims], w2[fc1_dims:]
    b2 = jnp.zeros((1, fc2_dims), jnp.float32)
    wq = _kaiming_linear(keys[2], fc2_dims, 1)
    bq = jnp.zeros((1, 1), jnp.float32)
    # Q2 head
    w1b = _kaiming_linear(keys[3], input_dim, fc1_dims)
    b1b = jnp.zeros((1, fc1_dims), jnp.float32)
    w2b = _kaiming_linear(keys[4], fc1_dims + n_actions, fc2_dims)
    w2xb, w2ab = w2b[:fc1_dims], w2b[fc1_dims:]
    b2b = jnp.zeros((1, fc2_dims), jnp.float32)
    wqb = _kaiming_linear(keys[5], fc2_dims, 1)
    bqb = jnp.zeros((1, 1), jnp.float32)
    return (w1, b1, w2x, w2a, b2, wq, bq,
            w1b, b1b, w2xb, w2ab, b2b, wqb, bqb)


def pack_params(params, dtype=jnp.float32):
    """Fuse the two Q heads into stacked / block-diagonal weight slabs.

    No zero K-rows: state and action feed the kernel as separate inputs.
    Weights are cast to the MXU dtype; biases stay f32 (added to the f32
    accumulators).
    """
    (w1, b1, w2x, w2a, b2, wq, bq,
     w1b, b1b, w2xb, w2ab, b2b, wqb, bqb) = params
    fc1 = w1.shape[1]
    fc2 = w2x.shape[1]

    # fc1 (both heads), columns = [q1 | q2].
    w1f = jnp.concatenate([w1, w1b], axis=1)            # (D, 2*fc1)
    b1f = jnp.concatenate([b1, b1b], axis=1)            # (1, 2*fc1)

    # fc2 hidden part: block-diagonal over the two heads.
    w2h = jnp.zeros((2 * fc1, 2 * fc2), jnp.float32)
    w2h = w2h.at[:fc1, :fc2].set(w2x).at[fc1:, fc2:].set(w2xb)

    # fc2 action part, columns = [q1 | q2].
    w2af = jnp.concatenate([w2a, w2ab], axis=1)         # (A, 2*fc2)
    b2f = jnp.concatenate([b2, b2b], axis=1)            # (1, 2*fc2)

    # Final layer: block-diagonal -> (2*fc2, 2), output columns = [q1, q2].
    wqf = jnp.zeros((2 * fc2, 2), jnp.float32)
    wqf = wqf.at[:fc2, 0:1].set(wq).at[fc2:, 1:2].set(wqb)
    bqf = jnp.concatenate([bq, bqb], axis=1)            # (1, 2)

    cast = lambda w: w.astype(dtype)
    return (cast(w1f), b1f, cast(w2h), cast(w2af), b2f, cast(wqf), bqf)


# ----------------------------------------------------------------------------
# References.
# ----------------------------------------------------------------------------
def reference_forward_f32(state, action, params):
    """Direct port of the PyTorch module (two separate branches, f32)."""
    (w1, b1, w2x, w2a, b2, wq, bq,
     w1b, b1b, w2xb, w2ab, b2b, wqb, bqb) = params

    def branch(w1_, b1_, w2x_, w2a_, b2_, wq_, bq_):
        h1 = jax.nn.relu(state @ w1_ + b1_)
        h2 = jax.nn.relu(h1 @ w2x_ + action @ w2a_ + b2_)
        return h2 @ wq_ + bq_

    return (branch(w1, b1, w2x, w2a, b2, wq, bq),
            branch(w1b, b1b, w2xb, w2ab, b2b, wqb, bqb))


def reference_forward_fused(state, action, fused_params):
    """Same math as the kernel (identical casts) in plain JAX."""
    w1f, b1f, w2h, w2af, b2f, wqf, bqf = fused_params
    s = state.astype(w1f.dtype)
    a = action.astype(w2af.dtype)
    h1 = jnp.maximum(
        jnp.dot(s, w1f, preferred_element_type=jnp.float32) + b1f, 0.0)
    h2 = jnp.maximum(
        jnp.dot(h1.astype(w2h.dtype), w2h, preferred_element_type=jnp.float32)
        + jnp.dot(a, w2af, preferred_element_type=jnp.float32) + b2f, 0.0)
    q = jnp.dot(h2.astype(wqf.dtype), wqf,
                preferred_element_type=jnp.float32) + bqf
    return q[:, 0:1], q[:, 1:2]


# ----------------------------------------------------------------------------
# Self-test.
# ----------------------------------------------------------------------------
if __name__ == "__main__":
    # Small, module-consistent shapes: state [B, input_dim], action [B, n_actions].
    B, INPUT_DIM, FC1, FC2, N_ACTIONS = 4, 8, 32, 16, 2

    key = jax.random.PRNGKey(0)
    k_state, k_action, k_params = jax.random.split(key, 3)
    state = jax.random.normal(k_state, (B, INPUT_DIM), jnp.float32)
    action = jax.random.normal(k_action, (B, N_ACTIONS), jnp.float32)

    params = make_params(k_params, INPUT_DIM, FC1, FC2, N_ACTIONS)
    fused_f32 = pack_params(params, dtype=jnp.float32)
    fused_bf16 = pack_params(params, dtype=jnp.bfloat16)

    # Check A (host-side): the fused block-diagonal formulation reproduces the
    # original twin-branch module semantics exactly (f32 everywhere).
    qa1, qa2 = reference_forward_fused(state, action, fused_f32)
    qr1, qr2 = reference_forward_f32(state, action, params)
    assert jnp.allclose(qa1, qr1, atol=1e-4, rtol=1e-4)
    assert jnp.allclose(qa2, qr2, atol=1e-4, rtol=1e-4)

    # Check B (device): Pallas kernel with f32 weights matches the original
    # twin-branch module.
    q1, q2 = critic_forward(state, action, fused_f32)
    jax.block_until_ready((q1, q2))
    assert q1.shape == (B, 1) and q2.shape == (B, 1)
    assert jnp.allclose(q1, qr1, atol=1e-3, rtol=1e-3)
    assert jnp.allclose(q2, qr2, atol=1e-3, rtol=1e-3)

    # Check C (device): bf16-weight fast path matches the fused reference with
    # identical casts (f32 accumulation in both).
    q1b, q2b = critic_forward(state, action, fused_bf16)
    jax.block_until_ready((q1b, q2b))
    q1f, q2f = reference_forward_fused(state, action, fused_bf16)
    assert jnp.allclose(q1b, q1f, atol=2e-2, rtol=2e-2)
    assert jnp.allclose(q2b, q2f, atol=2e-2, rtol=2e-2)

    # Check D (device): batch not a multiple of 16 -> padding + a 2-step grid
    # (resident weights reused across steps).
    B2 = 100
    state2 = jax.random.normal(jax.random.PRNGKey(1), (B2, INPUT_DIM), jnp.float32)
    action2 = jax.random.normal(jax.random.PRNGKey(2), (B2, N_ACTIONS), jnp.float32)
    q1c, q2c = critic_forward(state2, action2, fused_f32)
    jax.block_until_ready((q1c, q2c))
    qr1c, qr2c = reference_forward_f32(state2, action2, params)
    assert q1c.shape == (B2, 1) and q2c.shape == (B2, 1)
    assert jnp.allclose(q1c, qr1c, atol=1e-3, rtol=1e-3)
    assert jnp.allclose(q2c, qr2c, atol=1e-3, rtol=1e-3)

    # TODO(synk): CriticNetwork.Q1 (single-head helper) is just column 0 of the
    # fused output; not exposed separately here.
    print("KERNEL_OK")
</pallas_src>

<mosaic_0001>
module attributes {stable_mosaic.version = 11 : i64} {
  func.func @_critic_kernel(%arg0: i32, %arg1: memref<16x8xf32, #tpu.memory_space<vmem>>, %arg2: memref<16x2xf32, #tpu.memory_space<vmem>>, %arg3: memref<8x64xf32, #tpu.memory_space<vmem>>, %arg4: memref<1x64xf32, #tpu.memory_space<vmem>>, %arg5: memref<64x32xf32, #tpu.memory_space<vmem>>, %arg6: memref<2x32xf32, #tpu.memory_space<vmem>>, %arg7: memref<1x32xf32, #tpu.memory_space<vmem>>, %arg8: memref<32x2xf32, #tpu.memory_space<vmem>>, %arg9: memref<1x2xf32, #tpu.memory_space<vmem>>, %arg10: memref<16x2xf32, #tpu.memory_space<vmem>>) attributes {dimension_semantics = [#tpu.dimension_semantics<parallel>], iteration_bounds = array<i64: 1>, scalar_prefetch = 0 : i64, scratch_operands = 0 : i64, tpu.core_type = #tpu.core_type<tc>, window_params = [{transform_indices = @transform_0, window_bounds = array<i64: 16, 8>}, {transform_indices = @transform_1, window_bounds = array<i64: 16, 2>}, {pipeline_mode = #tpu.pipeline_mode<synchronous>, transform_indices = @transform_2, window_bounds = array<i64: 8, 64>}, {pipeline_mode = #tpu.pipeline_mode<synchronous>, transform_indices = @transform_3, window_bounds = array<i64: 1, 64>}, {pipeline_mode = #tpu.pipeline_mode<synchronous>, transform_indices = @transform_4, window_bounds = array<i64: 64, 32>}, {pipeline_mode = #tpu.pipeline_mode<synchronous>, transform_indices = @transform_5, window_bounds = array<i64: 2, 32>}, {pipeline_mode = #tpu.pipeline_mode<synchronous>, transform_indices = @transform_6, window_bounds = array<i64: 1, 32>}, {pipeline_mode = #tpu.pipeline_mode<synchronous>, transform_indices = @transform_7, window_bounds = array<i64: 32, 2>}, {pipeline_mode = #tpu.pipeline_mode<synchronous>, transform_indices = @transform_8, window_bounds = array<i64: 1, 2>}, {transform_indices = @transform_9, window_bounds = array<i64: 16, 2>}]} {
    %c0 = arith.constant 0 : index
    %c0_0 = arith.constant 0 : index
    %0 = vector.load %arg1[%c0, %c0_0] : memref<16x8xf32, #tpu.memory_space<vmem>>, vector<16x8xf32>
    %c0_1 = arith.constant 0 : index
    %c0_2 = arith.constant 0 : index
    %1 = vector.load %arg2[%c0_1, %c0_2] : memref<16x2xf32, #tpu.memory_space<vmem>>, vector<16x2xf32>
    %c0_3 = arith.constant 0 : index
    %c0_4 = arith.constant 0 : index
    %2 = vector.load %arg3[%c0_3, %c0_4] : memref<8x64xf32, #tpu.memory_space<vmem>>, vector<8x64xf32>
    %cst = arith.constant dense<0.000000e+00> : vector<16x64xf32>
    %3 = tpu.matmul %0, %2, %cst {dimension_numbers = #tpu.dot_dimension_numbers<[1], [0], [0], [1], [0, 0, 1, 1], [], []>} : vector<16x8xf32>, vector<8x64xf32>, vector<16x64xf32> -> vector<16x64xf32>
    %c0_5 = arith.constant 0 : index
    %c0_6 = arith.constant 0 : index
    %4 = vector.load %arg4[%c0_5, %c0_6] : memref<1x64xf32, #tpu.memory_space<vmem>>, vector<1x64xf32>
    %5 = vector.broadcast %4 : vector<1x64xf32> to vector<16x64xf32>
    %6 = arith.addf %3, %5 : vector<16x64xf32>
    %cst_7 = arith.constant 0.000000e+00 : f32
    %7 = vector.broadcast %cst_7 : f32 to vector<16x64xf32>
    %8 = arith.maximumf %6, %7 : vector<16x64xf32>
    %c0_8 = arith.constant 0 : index
    %c0_9 = arith.constant 0 : index
    %9 = vector.load %arg5[%c0_8, %c0_9] : memref<64x32xf32, #tpu.memory_space<vmem>>, vector<64x32xf32>
    %cst_10 = arith.constant dense<0.000000e+00> : vector<16x32xf32>
    %10 = tpu.matmul %8, %9, %cst_10 {dimension_numbers = #tpu.dot_dimension_numbers<[1], [0], [0], [1], [0, 0, 1, 1], [], []>} : vector<16x64xf32>, vector<64x32xf32>, vector<16x32xf32> -> vector<16x32xf32>
    %c0_11 = arith.constant 0 : index
    %c0_12 = arith.constant 0 : index
    %11 = vector.load %arg6[%c0_11, %c0_12] : memref<2x32xf32, #tpu.memory_space<vmem>>, vector<2x32xf32>
    %cst_13 = arith.constant dense<0.000000e+00> : vector<16x32xf32>
    %12 = tpu.matmul %1, %11, %cst_13 {dimension_numbers = #tpu.dot_dimension_numbers<[1], [0], [0], [1], [0, 0, 1, 1], [], []>} : vector<16x2xf32>, vector<2x32xf32>, vector<16x32xf32> -> vector<16x32xf32>
    %13 = arith.addf %10, %12 : vector<16x32xf32>
    %c0_14 = arith.constant 0 : index
    %c0_15 = arith.constant 0 : index
    %14 = vector.load %arg7[%c0_14, %c0_15] : memref<1x32xf32, #tpu.memory_space<vmem>>, vector<1x32xf32>
    %15 = vector.broadcast %14 : vector<1x32xf32> to vector<16x32xf32>
    %16 = arith.addf %13, %15 : vector<16x32xf32>
    %cst_16 = arith.constant 0.000000e+00 : f32
    %17 = vector.broadcast %cst_16 : f32 to vector<16x32xf32>
    %18 = arith.maximumf %16, %17 : vector<16x32xf32>
    %c0_17 = arith.constant 0 : index
    %c0_18 = arith.constant 0 : index
    %19 = vector.load %arg8[%c0_17, %c0_18] : memref<32x2xf32, #tpu.memory_space<vmem>>, vector<32x2xf32>
    %cst_19 = arith.constant dense<0.000000e+00> : vector<16x2xf32>
    %20 = tpu.matmul %18, %19, %cst_19 {dimension_numbers = #tpu.dot_dimension_numbers<[1], [0], [0], [1], [0, 0, 1, 1], [], []>} : vector<16x32xf32>, vector<32x2xf32>, vector<16x2xf32> -> vector<16x2xf32>
    %c0_20 = arith.constant 0 : index
    %c0_21 = arith.constant 0 : index
    %21 = vector.load %arg9[%c0_20, %c0_21] : memref<1x2xf32, #tpu.memory_space<vmem>>, vector<1x2xf32>
    %22 = vector.broadcast %21 : vector<1x2xf32> to vector<16x2xf32>
    %23 = arith.addf %20, %22 : vector<16x2xf32>
    %c0_22 = arith.constant 0 : index
    %c0_23 = arith.constant 0 : index
    %24 = vector.load %arg10[%c0_22, %c0_23] : memref<16x2xf32, #tpu.memory_space<vmem>>, vector<16x2xf32>
    tpu.vector_store %arg10[%c0_22, %c0_23], %23 {strides = array<i32>} : memref<16x2xf32, #tpu.memory_space<vmem>>, vector<16x2xf32>,
    return
  }
  func.func @transform_0(%arg0: i32) -> (i32, i32) {
    %c0_i32 = arith.constant 0 : i32
    %c0_i32_0 = arith.constant 0 : i32
    return %arg0, %c0_i32 : i32, i32
  }
  func.func @transform_1(%arg0: i32) -> (i32, i32) {
    %c0_i32 = arith.constant 0 : i32
    %c0_i32_0 = arith.constant 0 : i32
    return %arg0, %c0_i32 : i32, i32
  }
  func.func @transform_2(%arg0: i32) -> (i32, i32) {
    %c0_i32 = arith.constant 0 : i32
    %c0_i32_0 = arith.constant 0 : i32
    %c0_i32_1 = arith.constant 0 : i32
    return %c0_i32, %c0_i32_0 : i32, i32
  }
  func.func @transform_3(%arg0: i32) -> (i32, i32) {
    %c0_i32 = arith.constant 0 : i32
    %c0_i32_0 = arith.constant 0 : i32
    %c0_i32_1 = arith.constant 0 : i32
    return %c0_i32, %c0_i32_0 : i32, i32
  }
  func.func @transform_4(%arg0: i32) -> (i32, i32) {
    %c0_i32 = arith.constant 0 : i32
    %c0_i32_0 = arith.constant 0 : i32
    %c0_i32_1 = arith.constant 0 : i32
    return %c0_i32, %c0_i32_0 : i32, i32
  }
  func.func @transform_5(%arg0: i32) -> (i32, i32) {
    %c0_i32 = arith.constant 0 : i32
    %c0_i32_0 = arith.constant 0 : i32
    %c0_i32_1 = arith.constant 0 : i32
    return %c0_i32, %c0_i32_0 : i32, i32
  }
  func.func @transform_6(%arg0: i32) -> (i32, i32) {
    %c0_i32 = arith.constant 0 : i32
    %c0_i32_0 = arith.constant 0 : i32
    %c0_i32_1 = arith.constant 0 : i32
    return %c0_i32, %c0_i32_0 : i32, i32
  }
  func.func @transform_7(%arg0: i32) -> (i32, i32) {
    %c0_i32 = arith.constant 0 : i32
    %c0_i32_0 = arith.constant 0 : i32
    %c0_i32_1 = arith.constant 0 : i32
    return %c0_i32, %c0_i32_0 : i32, i32
  }
  func.func @transform_8(%arg0: i32) -> (i32, i32) {
    %c0_i32 = arith.constant 0 : i32
    %c0_i32_0 = arith.constant 0 : i32
    %c0_i32_1 = arith.constant 0 : i32
    return %c0_i32, %c0_i32_0 : i32, i32
  }
  func.func @transform_9(%arg0: i32) -> (i32, i32) {
    %c0_i32 = arith.constant 0 : i32
    %c0_i32_0 = arith.constant 0 : i32
    return %arg0, %c0_i32 : i32, i32
  }
}

</mosaic_0001>

<llo_original>
// kernel: critic_forward.1
$region0: #{critic_forward.1}
  #allocation0 [shape = 'u32[]', space=smem, size = 0x4, offset = 0x4, fixed_abs, tag = 'smem constant byte address 0x4 - core index']
  #allocation1 [shape = 'u32[144,128]{1,0:T(1,128)}', space=vmem, size = 0x12000, scoped, tag = 'internal scratch']
  %s0 = inlined_call_operand.vmem [shape: f32[16,8], index: 0, kind: input, shape index: {}]
  %s1 = inlined_call_operand.vmem [shape: f32[16,2], index: 1, kind: input, shape index: {}]
  %s2 = inlined_call_operand.vmem [shape: f32[8,64], index: 2, kind: input, shape index: {}]
  %s3 = inlined_call_operand.vmem [shape: f32[1,64], index: 3, kind: input, shape index: {}]
  %s4 = inlined_call_operand.vmem [shape: f32[64,32], index: 4, kind: input, shape index: {}]
  %s5 = inlined_call_operand.vmem [shape: f32[2,32], index: 5, kind: input, shape index: {}]
  %s6 = inlined_call_operand.vmem [shape: f32[1,32], index: 6, kind: input, shape index: {}]
  %s7 = inlined_call_operand.vmem [shape: f32[32,2], index: 7, kind: input, shape index: {}]
  %s8 = inlined_call_operand.vmem [shape: f32[1,2], index: 8, kind: input, shape index: {}]
  %s9 = inlined_call_operand.vmem [shape: f32[16,2], index: 9, kind: output, shape index: {}]
  %s10 = sld [smem:[#allocation0]]
  $region46: #{critic_forward.1} parent=0
    _
  %s12 = ssub.s32 1, %s10
  %s13 = scalar_select 0, %s12, %s10
  // Predicated region
  $region2: #{critic_forward.1} parent=0 // pred_check
    _
  $region3: #{critic_forward.1} parent=0 // pred_check_branch
    %15 = sbr.rel (0) target = $region5
  $region4: #{critic_forward.1} parent=0 // pred_region
    _
  $region5: #{critic_forward.1} parent=0 // pred_fallthru
    _
  // Predicated region
  $region6: #{critic_forward.1} parent=0 // pred_check
    _
  $region7: #{critic_forward.1} parent=0 // pred_check_branch
    %17 = sbr.rel (0) target = $region9
  $region8: #{critic_forward.1} parent=0 // pred_region
    _
  $region9: #{critic_forward.1} parent=0 // pred_fallthru
    _
  // Predicated region
  $region10: #{critic_forward.1} parent=0 // pred_check
    _
  $region11: #{critic_forward.1} parent=0 // pred_check_branch
    %19 = sbr.rel (0) target = $region13
  $region12: #{critic_forward.1} parent=0 // pred_region
    _
  $region13: #{critic_forward.1} parent=0 // pred_fallthru
    _
  // Predicated region
  $region14: #{critic_forward.1} parent=0 // pred_check
    _
  $region15: #{critic_forward.1} parent=0 // pred_check_branch
    %21 = sbr.rel (0) target = $region17
  $region16: #{critic_forward.1} parent=0 // pred_region
    _
  $region17: #{critic_forward.1} parent=0 // pred_fallthru
    _
  // Predicated region
  $region18: #{critic_forward.1} parent=0 // pred_check
    _
  $region19: #{critic_forward.1} parent=0 // pred_check_branch
    %23 = sbr.rel (0) target = $region21
  $region20: #{critic_forward.1} parent=0 // pred_region
    _
  $region21: #{critic_forward.1} parent=0 // pred_fallthru
    _
  // Predicated region
  $region22: #{critic_forward.1} parent=0 // pred_check
    _
  $region23: #{critic_forward.1} parent=0 // pred_check_branch
    %25 = sbr.rel (0) target = $region25
  $region24: #{critic_forward.1} parent=0 // pred_region
    _
  $region25: #{critic_forward.1} parent=0 // pred_fallthru
    _
  // Predicated region
  $region26: #{critic_forward.1} parent=0 // pred_check
    _
  $region27: #{critic_forward.1} parent=0 // pred_check_branch
    %27 = sbr.rel (0) target = $region29
  $region28: #{critic_forward.1} parent=0 // pred_region
    _
  $region29: #{critic_forward.1} parent=0 // pred_fallthru
    _
  // Predicated region
  $region30: #{critic_forward.1} parent=0 // pred_check
    _
  $region31: #{critic_forward.1} parent=0 // pred_check_branch
    %29 = sbr.rel (0) target = $region33
  $region32: #{critic_forward.1} parent=0 // pred_region
    _
  $region33: #{critic_forward.1} parent=0 // pred_fallthru
    _
  // Predicated region
  $region34: #{critic_forward.1} parent=0 // pred_check
    _
  $region35: #{critic_forward.1} parent=0 // pred_check_branch
    %31 = sbr.rel (0) target = $region37
  $region36: #{critic_forward.1} parent=0 // pred_region
    _
  $region37: #{critic_forward.1} parent=0 // pred_fallthru
    _
  %v32 = vld [vmem:[%s0] sm:$0xff]
  %v33 = vld [vmem:[%s0 + $0x8] sm:$0xff]
  %v34 = vld [vmem:[%s1] sm:$0xff]
  %v35 = vld [vmem:[%s1 + $0x8] sm:$0xff]
  %v36 = vld [vmem:[%s2] sm:$0xff]
  %v37 = vld [vmem:[%s3] sm:$0x1]
  %v39 = vlaneseq
  %v40 = vshrl.u32 %v39, 7
  %v41 = vsub.s32 0, %v40
  %v42 = vrot.slane %v37, %v41
  %vm44 = vcmask 64512
  %v46 = vsel %vm44, %v32, 0
  %v49 = vsel %vm44, %v33, 0
  %51 = vmatprep.subr.mxu0 0.0
  %52 = vmatpush1.msra.mxu0 %v36
  %53 = vmatprep.subr.mxu0 0.0
  %54 = vmatpush1.msra.mxu0 0.0
  %55 = vmatprep.subr.mxu0 0.0
  %56 = vmatpush1.msra.mxu0 0.0
  %57 = vmatprep.subr.mxu0 0.0
  %58 = vmatpush1.msra.mxu0 0.0
  %59 = vmatprep.subr.mxu0 0.0
  %60 = vmatpush1.msra.mxu0 0.0
  %61 = vmatprep.subr.mxu0 0.0
  %62 = vmatpush1.msra.mxu0 0.0
  %63 = vmatprep.subr.mxu0 0.0
  %64 = vmatpush1.msra.mxu0 0.0
  %65 = vmatprep.subr.mxu0 0.0
  %66 = vmatpush1.msra.mxu0 0.0
  %67 = vmatprep.subr.mxu0 0.0
  %68 = vmatpush1.msra.mxu0 0.0
  %69 = vmatprep.subr.mxu0 0.0
  %70 = vmatpush1.msra.mxu0 0.0
  %71 = vmatprep.subr.mxu0 0.0
  %72 = vmatpush1.msra.mxu0 0.0
  %73 = vmatprep.subr.mxu0 0.0
  %74 = vmatpush1.msra.mxu0 0.0
  %75 = vmatprep.subr.mxu0 0.0
  %76 = vmatpush1.msra.mxu0 0.0
  %77 = vmatprep.subr.mxu0 0.0
  %78 = vmatpush1.msra.mxu0 0.0
  %79 = vmatprep.subr.mxu0 0.0
  %80 = vmatpush1.msra.mxu0 0.0
  %81 = vmatprep.subr.mxu0 0.0
  %82 = vmatpush1.msra.mxu0 0.0
  %83 = vmatprep.subr.mxu0 0.0
  %84 = vmatpush1.msra.mxu0 0.0
  %85 = vmatprep.subr.mxu0 0.0
  %86 = vmatpush1.msra.mxu0 0.0
  %87 = vmatprep.subr.mxu0 0.0
  %88 = vmatpush1.msra.mxu0 0.0
  %89 = vmatprep.subr.mxu0 0.0
  %90 = vmatpush1.msra.mxu0 0.0
  %91 = vmatprep.subr.mxu0 0.0
  %92 = vmatpush1.msra.mxu0 0.0
  %93 = vmatprep.subr.mxu0 0.0
  %94 = vmatpush1.msra.mxu0 0.0
  %95 = vmatprep.subr.mxu0 0.0
  %96 = vmatpush1.msra.mxu0 0.0
  %97 = vmatprep.subr.mxu0 0.0
  %98 = vmatpush1.msra.mxu0 0.0
  %99 = vmatprep.subr.mxu0 0.0
  %100 = vmatpush1.msra.mxu0 0.0
  %101 = vmatprep.subr.mxu0 0.0
  %102 = vmatpush1.msra.mxu0 0.0
  %103 = vmatprep.subr.mxu0 0.0
  %104 = vmatpush1.msra.mxu0 0.0
  %105 = vmatprep.subr.mxu0 0.0
  %106 = vmatpush1.msra.mxu0 0.0
  %107 = vmatprep.subr.mxu0 0.0
  %108 = vmatpush1.msra.mxu0 0.0
  %109 = vmatprep.subr.mxu0 0.0
  %110 = vmatpush1.msra.mxu0 0.0
  %111 = vmatprep.subr.mxu0 0.0
  %112 = vmatpush1.msra.mxu0 0.0
  %113 = vmatprep.subr.mxu0 0.0
  %114 = vmatpush1.msra.mxu0 0.0
  %115 = vmatprep.mubr.f32.mxu0 0.0
  %116 = vmatmul.mubr.f32.gmra.mrb[0].mxu0 %v46
  %v117 = vpop.f32.mrb[0].mxu0
  %v118 = vadd.f32 %v42, %v117
  %v119 = vpop.f32.mrb[0].mxu0
  %120 = vmatprep.mubr.f32.mxu0 0.0
  %121 = vmatmul.mubr.f32.gmra.mrb[0].mxu0 %v49
  %v122 = vpop.f32.mrb[0].mxu0
  %v123 = vadd.f32 %v42, %v122
  %v124 = vpop.f32.mrb[0].mxu0
  %125 = vdwg.mxu0
  %v126 = vmax.f32 %v118, 0.0
  %v127 = vmax.f32 %v123, 0.0
  %v128 = vld [vmem:[%s4] sm:$0xff]
  %v129 = vld [vmem:[%s4 + $0x8] sm:$0xff]
  %v130 = vld [vmem:[%s4 + $0x10] sm:$0xff]
  %v131 = vld [vmem:[%s4 + $0x18] sm:$0xff]
  %v132 = vld [vmem:[%s4 + $0x20] sm:$0xff]
  %v133 = vld [vmem:[%s4 + $0x28] sm:$0xff]
  %v134 = vld [vmem:[%s4 + $0x30] sm:$0xff]
  %v135 = vld [vmem:[%s4 + $0x38] sm:$0xff]
  %v136 = vld [vmem:[%s5] sm:$0x3]
  %vm137 = vcmask 15360
  %v139 = vsel %vm137, %v34, 0
  %v142 = vsel %vm137, %v35, 0
  %vm144 = vcmask 1041408
  %v146 = vsel %vm144, %v136, 0
  %148 = vmatprep.subr.mxu0 0.0
  %149 = vmatpush1.msra.mxu0 %v146
  %150 = vmatprep.subr.mxu0 0.0
  %151 = vmatpush1.msra.mxu0 0.0
  %152 = vmatprep.subr.mxu0 0.0
  %153 = vmatpush1.msra.mxu0 0.0
  %154 = vmatprep.subr.mxu0 0.0
  %155 = vmatpush1.msra.mxu0 0.0
  %156 = vmatprep.subr.mxu0 0.0
  %157 = vmatpush1.msra.mxu0 0.0
  %158 = vmatprep.subr.mxu0 0.0
  %159 = vmatpush1.msra.mxu0 0.0
  %160 = vmatprep.subr.mxu0 0.0
  %161 = vmatpush1.msra.mxu0 0.0
  %162 = vmatprep.subr.mxu0 0.0
  %163 = vmatpush1.msra.mxu0 0.0
  %164 = vmatprep.subr.mxu0 0.0
  %165 = vmatpush1.msra.mxu0 0.0
  %166 = vmatprep.subr.mxu0 0.0
  %167 = vmatpush1.msra.mxu0 0.0
  %168 = vmatprep.subr.mxu0 0.0
  %169 = vmatpush1.msra.mxu0 0.0
  %170 = vmatprep.subr.mxu0 0.0
  %171 = vmatpush1.msra.mxu0 0.0
  %172 = vmatprep.subr.mxu0 0.0
  %173 = vmatpush1.msra.mxu0 0.0
  %174 = vmatprep.subr.mxu0 0.0
  %175 = vmatpush1.msra.mxu0 0.0
  %176 = vmatprep.subr.mxu0 0.0
  %177 = vmatpush1.msra.mxu0 0.0
  %178 = vmatprep.subr.mxu0 0.0
  %179 = vmatpush1.msra.mxu0 0.0
  %180 = vmatprep.subr.mxu0 0.0
  %181 = vmatpush1.msra.mxu0 0.0
  %182 = vmatprep.subr.mxu0 0.0
  %183 = vmatpush1.msra.mxu0 0.0
  %184 = vmatprep.subr.mxu0 0.0
  %185 = vmatpush1.msra.mxu0 0.0
  %186 = vmatprep.subr.mxu0 0.0
  %187 = vmatpush1.msra.mxu0 0.0
  %188 = vmatprep.subr.mxu0 0.0
  %189 = vmatpush1.msra.mxu0 0.0
  %190 = vmatprep.subr.mxu0 0.0
  %191 = vmatpush1.msra.mxu0 0.0
  %192 = vmatprep.subr.mxu0 0.0
  %193 = vmatpush1.msra.mxu0 0.0
  %194 = vmatprep.subr.mxu0 0.0
  %195 = vmatpush1.msra.mxu0 0.0
  %196 = vmatprep.subr.mxu0 0.0
  %197 = vmatpush1.msra.mxu0 0.0
  %198 = vmatprep.subr.mxu0 0.0
  %199 = vmatpush1.msra.mxu0 0.0
  %200 = vmatprep.subr.mxu0 0.0
  %201 = vmatpush1.msra.mxu0 0.0
  %202 = vmatprep.subr.mxu0 0.0
  %203 = vmatpush1.msra.mxu0 0.0
  %204 = vmatprep.subr.mxu0 0.0
  %205 = vmatpush1.msra.mxu0 0.0
  %206 = vmatprep.subr.mxu0 0.0
  %207 = vmatpush1.msra.mxu0 0.0
  %208 = vmatprep.subr.mxu0 0.0
  %209 = vmatpush1.msra.mxu0 0.0
  %210 = vmatprep.subr.mxu0 0.0
  %211 = vmatpush1.msra.mxu0 0.0
  %212 = vmatprep.mubr.f32.mxu0 0.0
  %213 = vmatmul.mubr.f32.gmra.mrb[0].mxu0 %v139
  %v214 = vpop.f32.mrb[0].mxu0
  %v215 = vadd.f32 0.0, %v214
  %v216 = vpop.f32.mrb[0].mxu0
  %217 = vmatprep.mubr.f32.mxu0 0.0
  %218 = vmatmul.mubr.f32.gmra.mrb[0].mxu0 %v142
  %v219 = vpop.f32.mrb[0].mxu0
  %v220 = vadd.f32 0.0, %v219
  %v221 = vpop.f32.mrb[0].mxu0
  %222 = vdwg.mxu0
  %vm223 = vcmask 523264
  %v225 = vsel %vm223, %v126, 0
  %v228 = vsel %vm223, %v127, 0
  %230 = vmatprep.subr.mxu0 0.0
  %231 = vmatpush1.msra.mxu0 %v128
  %232 = vmatprep.subr.mxu0 0.0
  %233 = vmatpush1.msra.mxu0 %v129
  %234 = vmatprep.subr.mxu0 0.0
  %235 = vmatpush1.msra.mxu0 %v130
  %236 = vmatprep.subr.mxu0 0.0
  %237 = vmatpush1.msra.mxu0 %v131
  %238 = vmatprep.subr.mxu0 0.0
  %239 = vmatpush1.msra.mxu0 %v132
  %240 = vmatprep.subr.mxu0 0.0
  %241 = vmatpush1.msra.mxu0 %v133
  %242 = vmatprep.subr.mxu0 0.0
  %243 = vmatpush1.msra.mxu0 %v134
  %244 = vmatprep.subr.mxu0 0.0
  %245 = vmatpush1.msra.mxu0 %v135
  %246 = vmatprep.subr.mxu0 0.0
  %247 = vmatpush1.msra.mxu0 0.0
  %248 = vmatprep.subr.mxu0 0.0
  %249 = vmatpush1.msra.mxu0 0.0
  %250 = vmatprep.subr.mxu0 0.0
  %251 = vmatpush1.msra.mxu0 0.0
  %252 = vmatprep.subr.mxu0 0.0
  %253 = vmatpush1.msra.mxu0 0.0
  %254 = vmatprep.subr.mxu0 0.0
  %255 = vmatpush1.msra.mxu0 0.0
  %256 = vmatprep.subr.mxu0 0.0
  %257 = vmatpush1.msra.mxu0 0.0
  %258 = vmatprep.subr.mxu0 0.0
  %259 = vmatpush1.msra.mxu0 0.0
  %260 = vmatprep.subr.mxu0 0.0
  %261 = vmatpush1.msra.mxu0 0.0
  %262 = vmatprep.subr.mxu0 0.0
  %263 = vmatpush1.msra.mxu0 0.0
  %264 = vmatprep.subr.mxu0 0.0
  %265 = vmatpush1.msra.mxu0 0.0
  %266 = vmatprep.subr.mxu0 0.0
  %267 = vmatpush1.msra.mxu0 0.0
  %268 = vmatprep.subr.mxu0 0.0
  %269 = vmatpush1.msra.mxu0 0.0
  %270 = vmatprep.subr.mxu0 0.0
  %271 = vmatpush1.msra.mxu0 0.0
  %272 = vmatprep.subr.mxu0 0.0
  %273 = vmatpush1.msra.mxu0 0.0
  %274 = vmatprep.subr.mxu0 0.0
  %275 = vmatpush1.msra.mxu0 0.0
  %276 = vmatprep.subr.mxu0 0.0
  %277 = vmatpush1.msra.mxu0 0.0
  %278 = vmatprep.subr.mxu0 0.0
  %279 = vmatpush1.msra.mxu0 0.0
  %280 = vmatprep.subr.mxu0 0.0
  %281 = vmatpush1.msra.mxu0 0.0
  %282 = vmatprep.subr.mxu0 0.0
  %283 = vmatpush1.msra.mxu0 0.0
  %284 = vmatprep.subr.mxu0 0.0
  %285 = vmatpush1.msra.mxu0 0.0
  %286 = vmatprep.subr.mxu0 0.0
  %287 = vmatpush1.msra.mxu0 0.0
  %288 = vmatprep.subr.mxu0 0.0
  %289 = vmatpush1.msra.mxu0 0.0
  %290 = vmatprep.subr.mxu0 0.0
  %291 = vmatpush1.msra.mxu0 0.0
  %292 = vmatprep.subr.mxu0 0.0
  %293 = vmatpush1.msra.mxu0 0.0
  %294 = vmatprep.mubr.f32.mxu0 0.0
  %295 = vmatmul.mubr.f32.gmra.mrb[0].mxu0 %v225
  %v296 = vpop.f32.mrb[0].mxu0
  %v297 = vadd.f32 %v215, %v296
  %v298 = vpop.f32.mrb[0].mxu0
  %299 = vmatprep.mubr.f32.mxu0 0.0
  %300 = vmatmul.mubr.f32.gmra.mrb[0].mxu0 %v228
  %v301 = vpop.f32.mrb[0].mxu0
  %v302 = vadd.f32 %v220, %v301
  %v303 = vpop.f32.mrb[0].mxu0
  %304 = vdwg.mxu0
  %v305 = vld [vmem:[%s6] sm:$0x1]
  %v307 = vlaneseq
  %v308 = vshrl.u32 %v307, 7
  %v309 = vsub.s32 0, %v308
  %v310 = vrot.slane %v305, %v309
  %v312 = vadd.f32 %v297, %v310
  %v313 = vadd.f32 %v302, %v310
  %v314 = vmax.f32 %v312, 0.0
  %v315 = vmax.f32 %v313, 0.0
  %v316 = vld [vmem:[%s7] sm:$0xff]
  %v317 = vld [vmem:[%s7 + $0x8] sm:$0xff]
  %v318 = vld [vmem:[%s7 + $0x10] sm:$0xff]
  %v319 = vld [vmem:[%s7 + $0x18] sm:$0xff]
  %v320 = vld [vmem:[%s8] sm:$0x1]
  %v322 = vlaneseq
  %v323 = vshrl.u32 %v322, 7
  %v324 = vsub.s32 0, %v323
  %v325 = vrot.slane %v320, %v324
  %vm327 = vcmask 261120
  %v329 = vsel %vm327, %v314, 0
  %v332 = vsel %vm327, %v315, 0
  %334 = vmatprep.subr.mxu0 0.0
  %335 = vmatpush1.msra.mxu0 %v316
  %336 = vmatprep.subr.mxu0 0.0
  %337 = vmatpush1.msra.mxu0 %v317
  %338 = vmatprep.subr.mxu0 0.0
  %339 = vmatpush1.msra.mxu0 %v318
  %340 = vmatprep.subr.mxu0 0.0
  %341 = vmatpush1.msra.mxu0 %v319
  %342 = vmatprep.subr.mxu0 0.0
  %343 = vmatpush1.msra.mxu0 0.0
  %344 = vmatprep.subr.mxu0 0.0
  %345 = vmatpush1.msra.mxu0 0.0
  %346 = vmatprep.subr.mxu0 0.0
  %347 = vmatpush1.msra.mxu0 0.0
  %348 = vmatprep.subr.mxu0 0.0
  %349 = vmatpush1.msra.mxu0 0.0
  %350 = vmatprep.subr.mxu0 0.0
  %351 = vmatpush1.msra.mxu0 0.0
  %352 = vmatprep.subr.mxu0 0.0
  %353 = vmatpush1.msra.mxu0 0.0
  %354 = vmatprep.subr.mxu0 0.0
  %355 = vmatpush1.msra.mxu0 0.0
  %356 = vmatprep.subr.mxu0 0.0
  %357 = vmatpush1.msra.mxu0 0.0
  %358 = vmatprep.subr.mxu0 0.0
  %359 = vmatpush1.msra.mxu0 0.0
  %360 = vmatprep.subr.mxu0 0.0
  %361 = vmatpush1.msra.mxu0 0.0
  %362 = vmatprep.subr.mxu0 0.0
  %363 = vmatpush1.msra.mxu0 0.0
  %364 = vmatprep.subr.mxu0 0.0
  %365 = vmatpush1.msra.mxu0 0.0
  %366 = vmatprep.subr.mxu0 0.0
  %367 = vmatpush1.msra.mxu0 0.0
  %368 = vmatprep.subr.mxu0 0.0
  %369 = vmatpush1.msra.mxu0 0.0
  %370 = vmatprep.subr.mxu0 0.0
  %371 = vmatpush1.msra.mxu0 0.0
  %372 = vmatprep.subr.mxu0 0.0
  %373 = vmatpush1.msra.mxu0 0.0
  %374 = vmatprep.subr.mxu0 0.0
  %375 = vmatpush1.msra.mxu0 0.0
  %376 = vmatprep.subr.mxu0 0.0
  %377 = vmatpush1.msra.mxu0 0.0
  %378 = vmatprep.subr.mxu0 0.0
  %379 = vmatpush1.msra.mxu0 0.0
  %380 = vmatprep.subr.mxu0 0.0
  %381 = vmatpush1.msra.mxu0 0.0
  %382 = vmatprep.subr.mxu0 0.0
  %383 = vmatpush1.msra.mxu0 0.0
  %384 = vmatprep.subr.mxu0 0.0
  %385 = vmatpush1.msra.mxu0 0.0
  %386 = vmatprep.subr.mxu0 0.0
  %387 = vmatpush1.msra.mxu0 0.0
  %388 = vmatprep.subr.mxu0 0.0
  %389 = vmatpush1.msra.mxu0 0.0
  %390 = vmatprep.subr.mxu0 0.0
  %391 = vmatpush1.msra.mxu0 0.0
  %392 = vmatprep.subr.mxu0 0.0
  %393 = vmatpush1.msra.mxu0 0.0
  %394 = vmatprep.subr.mxu0 0.0
  %395 = vmatpush1.msra.mxu0 0.0
  %396 = vmatprep.subr.mxu0 0.0
  %397 = vmatpush1.msra.mxu0 0.0
  %398 = vmatprep.mubr.f32.mxu0 0.0
  %399 = vmatmul.mubr.f32.gmra.mrb[0].mxu0 %v329
  %v400 = vpop.f32.mrb[0].mxu0
  %v401 = vadd.f32 %v325, %v400
  %v402 = vpop.f32.mrb[0].mxu0
  %403 = vmatprep.mubr.f32.mxu0 0.0
  %404 = vmatmul.mubr.f32.gmra.mrb[0].mxu0 %v332
  %v405 = vpop.f32.mrb[0].mxu0
  %v406 = vadd.f32 %v325, %v405
  %v407 = vpop.f32.mrb[0].mxu0
  %408 = vdwg.mxu0
  %409 = vst.msk [vmem:[%s9] sm:$0xff] %vm137, %v401
  %410 = vst.msk [vmem:[%s9 + $0x8] sm:$0xff] %vm137, %v406
  // Predicated region
  $region38: #{critic_forward.1} parent=0 // pred_check
    _
  $region39: #{critic_forward.1} parent=0 // pred_check_branch
    %412 = sbr.rel (0) target = $region41
  $region40: #{critic_forward.1} parent=0 // pred_region
    _
  $region41: #{critic_forward.1} parent=0 // pred_fallthru
    _
  // Predicated region
  $region42: #{critic_forward.1} parent=0 // pred_check
    _
  $region43: #{critic_forward.1} parent=0 // pred_check_branch
    %414 = sbr.rel (0) target = $region45
  $region44: #{critic_forward.1} parent=0 // pred_region
    _
  $region45: #{critic_forward.1} parent=0 // pred_fallthru
    _

</llo_original>
